<compile_context>
chip_gen: v7x
topology: tpu7x:2x2x1
jax: 0.10.0
libtpu: 0.0.40
codegen_flags: <defaults>
</compile_context>

<pallas_src>
import functools

import jax
import jax.numpy as jnp
from jax.experimental import pallas as pl
from jax.experimental.pallas import tpu as pltpu

LANES = 128


def _round_up(x, m):
    return (x + m - 1) // m * m


def _actor_critic_kernel(x_ref, w1_ref, b1_ref, w2_ref, b2_ref, out_ref, *,
                         num_actions):
    x = x_ref[...]

    # Fused layer 1: h = relu(x @ [Wc1 | Wa1] + [bc1 | ba1])  -> (TILE_B, 2H)
    h = jnp.dot(x, w1_ref[...], preferred_element_type=jnp.float32) + b1_ref[...]
    h = jnp.maximum(h, 0.0)

    # Fused layer 2: block-diagonal W2 padded to 128 lanes    -> (TILE_B, 128)
    logits = jnp.dot(h.astype(w2_ref.dtype), w2_ref[...],
                     preferred_element_type=jnp.float32) + b2_ref[...]

    col = jax.lax.broadcasted_iota(jnp.int32, logits.shape, dimension=1)
    is_policy = jnp.logical_and(col >= 1, col < 1 + num_actions)

    # Masked softmax over the policy columns only (value/padding cols -> 0).
    masked = jnp.where(is_policy, logits, jnp.float32(-1e30))
    m = jnp.max(masked, axis=1, keepdims=True)
    e = jnp.exp(masked - m)
    denom = jnp.sum(e, axis=1, keepdims=True)
    policy = e * pl.reciprocal(denom, approx=True)

    # Critic value (final ReLU matches the PyTorch module) lives in column 0.
    value = jnp.where(col == 0, jnp.maximum(logits, 0.0), 0.0)

    out_ref[...] = (policy + value).astype(out_ref.dtype)


def actor_critic_forward(state, params, *, compute_dtype=jnp.float32,
                         tile_b=512):
    """state: (B, input_size) f32. Returns (value (B,1), policy (B,A)), f32."""
    B, input_size = state.shape
    hidden = params["wc1"].shape[1]
    num_actions = params["wa2"].shape[1]
    assert 1 + num_actions <= LANES, "policy width must fit one 128-lane slab"

    # ---- fuse layer-1 weights/biases: one (input, 2H) matmul ----
    w1 = jnp.concatenate([params["wc1"], params["wa1"]], axis=1).astype(compute_dtype)
    b1 = jnp.concatenate([params["bc1"], params["ba1"]], axis=1).astype(jnp.float32)

    # ---- fuse layer-2 into a block-diagonal, lane-dense (2H, 128) weight ----
    w2 = jnp.zeros((2 * hidden, LANES), jnp.float32)
    w2 = w2.at[:hidden, 0:1].set(params["wc2"])
    w2 = w2.at[hidden:, 1:1 + num_actions].set(params["wa2"])
    w2 = w2.astype(compute_dtype)
    b2 = jnp.zeros((1, LANES), jnp.float32)
    b2 = b2.at[:, 0:1].set(params["bc2"])
    b2 = b2.at[:, 1:1 + num_actions].set(params["ba2"])

    # ---- pad batch to a sublane-friendly multiple, build the batch grid ----
    tile = min(_round_up(tile_b, 16), _round_up(B, 16))
    b_pad = _round_up(B, tile)
    x = state.astype(compute_dtype)
    if b_pad != B:
        x = jnp.pad(x, ((0, b_pad - B), (0, 0)))
    grid = (b_pad // tile,)

    def resident(shape):  # weights/biases stay in VMEM across all batch tiles
        return pl.BlockSpec(shape, lambda i: (0,) * len(shape))

    out = pl.pallas_call(
        functools.partial(_actor_critic_kernel, num_actions=num_actions),
        out_shape=jax.ShapeDtypeStruct((b_pad, LANES), jnp.float32),
        grid=grid,
        in_specs=[
            pl.BlockSpec((tile, input_size), lambda i: (i, 0)),
            resident(w1.shape), resident(b1.shape),
            resident(w2.shape), resident(b2.shape),
        ],
        out_specs=pl.BlockSpec((tile, LANES), lambda i: (i, 0)),
        compiler_params=pltpu.CompilerParams(
            dimension_semantics=("parallel",)),
    )(x, w1, b1, w2, b2)

    value = out[:B, 0:1]
    policy = out[:B, 1:1 + num_actions]
    return value, policy


def init_params(key, input_size, hidden_size, output_size):
    """Deterministic PyTorch-Linear-style init (uniform +-1/sqrt(fan_in))."""
    ks = jax.random.split(key, 8)

    def linear(kw, kb, fan_in, fan_out):
        bound = 1.0 / jnp.sqrt(jnp.float32(fan_in))
        w = jax.random.uniform(kw, (fan_in, fan_out), jnp.float32, -bound, bound)
        b = jax.random.uniform(kb, (1, fan_out), jnp.float32, -bound, bound)
        return w, b

    wc1, bc1 = linear(ks[0], ks[1], input_size, hidden_size)
    wc2, bc2 = linear(ks[2], ks[3], hidden_size, 1)
    wa1, ba1 = linear(ks[4], ks[5], input_size, hidden_size)
    wa2, ba2 = linear(ks[6], ks[7], hidden_size, output_size)
    return dict(wc1=wc1, bc1=bc1, wc2=wc2, bc2=bc2,
                wa1=wa1, ba1=ba1, wa2=wa2, ba2=ba2)


def reference_forward(state, p):
    """Pure-JAX reference mirroring the PyTorch module."""
    v = jnp.maximum(state @ p["wc1"] + p["bc1"], 0.0)
    v = jnp.maximum(v @ p["wc2"] + p["bc2"], 0.0)
    a = jnp.maximum(state @ p["wa1"] + p["ba1"], 0.0)
    logits = a @ p["wa2"] + p["ba2"]
    return v, jax.nn.softmax(logits, axis=1)


if __name__ == "__main__":
    key = jax.random.PRNGKey(0)
    k_params, k_state, k_big = jax.random.split(key, 3)

    B, input_size, hidden_size, output_size = 2, 16, 32, 8
    params = init_params(k_params, input_size, hidden_size, output_size)
    state = jax.random.normal(k_state, (B, input_size), jnp.float32)
    v_ref, p_ref = reference_forward(state, params)

    # --- f32 compute path (tight check; policy looser due to approx recip) ---
    value, policy = actor_critic_forward(state, params)
    jax.block_until_ready((value, policy))
    assert value.shape == (B, 1) and policy.shape == (B, output_size)
    assert jnp.allclose(value, v_ref, atol=1e-3, rtol=1e-3)
    assert jnp.allclose(policy, p_ref, atol=1e-2, rtol=1e-2)
    assert jnp.allclose(jnp.sum(policy, axis=1), 1.0, atol=1e-2)

    # --- bf16 compute path (f32 accumulation; looser tolerance) ---
    v16, p16 = actor_critic_forward(state, params, compute_dtype=jnp.bfloat16)
    jax.block_until_ready((v16, p16))
    assert jnp.allclose(v16, v_ref, atol=5e-2, rtol=5e-2)
    assert jnp.allclose(p16, p_ref, atol=5e-2, rtol=5e-2)

    # --- multi-tile batch grid (exercises pipelining + batch padding) ---
    Bb = 1000
    big_state = jax.random.normal(k_big, (Bb, input_size), jnp.float32)
    vb, pb = actor_critic_forward(big_state, params, tile_b=256)
    jax.block_until_ready((vb, pb))
    vb_ref, pb_ref = reference_forward(big_state, params)
    assert vb.shape == (Bb, 1) and pb.shape == (Bb, output_size)
    assert jnp.allclose(vb, vb_ref, atol=1e-3, rtol=1e-3)
    assert jnp.allclose(pb, pb_ref, atol=1e-2, rtol=1e-2)

    print("KERNEL_OK")
</pallas_src>

<mosaic_0001>
module attributes {stable_mosaic.version = 11 : i64} {
  func.func @_actor_critic_kernel(%arg0: i32, %arg1: memref<16x16xf32, #tpu.memory_space<vmem>>, %arg2: memref<16x64xf32, #tpu.memory_space<vmem>>, %arg3: memref<1x64xf32, #tpu.memory_space<vmem>>, %arg4: memref<64x128xf32, #tpu.memory_space<vmem>>, %arg5: memref<1x128xf32, #tpu.memory_space<vmem>>, %arg6: memref<16x128xf32, #tpu.memory_space<vmem>>) attributes {dimension_semantics = [#tpu.dimension_semantics<parallel>], iteration_bounds = array<i64: 1>, scalar_prefetch = 0 : i64, scratch_operands = 0 : i64, tpu.core_type = #tpu.core_type<tc>, window_params = [{transform_indices = @transform_0, window_bounds = array<i64: 16, 16>}, {pipeline_mode = #tpu.pipeline_mode<synchronous>, transform_indices = @transform_1, window_bounds = array<i64: 16, 64>}, {pipeline_mode = #tpu.pipeline_mode<synchronous>, transform_indices = @transform_2, window_bounds = array<i64: 1, 64>}, {pipeline_mode = #tpu.pipeline_mode<synchronous>, transform_indices = @transform_3, window_bounds = array<i64: 64, 128>}, {pipeline_mode = #tpu.pipeline_mode<synchronous>, transform_indices = @transform_4, window_bounds = array<i64: 1, 128>}, {transform_indices = @transform_5, window_bounds = array<i64: 16, 128>}]} {
    %c0 = arith.constant 0 : index
    %c0_0 = arith.constant 0 : index
    %0 = vector.load %arg1[%c0, %c0_0] : memref<16x16xf32, #tpu.memory_space<vmem>>, vector<16x16xf32>
    %c0_1 = arith.constant 0 : index
    %c0_2 = arith.constant 0 : index
    %1 = vector.load %arg2[%c0_1, %c0_2] : memref<16x64xf32, #tpu.memory_space<vmem>>, vector<16x64xf32>
    %cst = arith.constant dense<0.000000e+00> : vector<16x64xf32>
    %2 = tpu.matmul %0, %1, %cst {dimension_numbers = #tpu.dot_dimension_numbers<[1], [0], [0], [1], [0, 0, 1, 1], [], []>} : vector<16x16xf32>, vector<16x64xf32>, vector<16x64xf32> -> vector<16x64xf32>
    %c0_3 = arith.constant 0 : index
    %c0_4 = arith.constant 0 : index
    %3 = vector.load %arg3[%c0_3, %c0_4] : memref<1x64xf32, #tpu.memory_space<vmem>>, vector<1x64xf32>
    %4 = vector.broadcast %3 : vector<1x64xf32> to vector<16x64xf32>
    %5 = arith.addf %2, %4 : vector<16x64xf32>
    %cst_5 = arith.constant 0.000000e+00 : f32
    %6 = vector.broadcast %cst_5 : f32 to vector<16x64xf32>
    %7 = arith.maximumf %5, %6 : vector<16x64xf32>
    %c0_6 = arith.constant 0 : index
    %c0_7 = arith.constant 0 : index
    %8 = vector.load %arg4[%c0_6, %c0_7] : memref<64x128xf32, #tpu.memory_space<vmem>>, vector<64x128xf32>
    %cst_8 = arith.constant dense<0.000000e+00> : vector<16x128xf32>
    %9 = tpu.matmul %7, %8, %cst_8 {dimension_numbers = #tpu.dot_dimension_numbers<[1], [0], [0], [1], [0, 0, 1, 1], [], []>} : vector<16x64xf32>, vector<64x128xf32>, vector<16x128xf32> -> vector<16x128xf32>
    %c0_9 = arith.constant 0 : index
    %c0_10 = arith.constant 0 : index
    %10 = vector.load %arg5[%c0_9, %c0_10] : memref<1x128xf32, #tpu.memory_space<vmem>>, vector<1x128xf32>
    %11 = vector.broadcast %10 : vector<1x128xf32> to vector<16x128xf32>
    %12 = arith.addf %9, %11 : vector<16x128xf32>
    %13 = tpu.iota {dimensions = array<i32: 1>} : vector<16x128xi32>
    %c1_i32 = arith.constant 1 : i32
    %14 = vector.broadcast %c1_i32 : i32 to vector<16x128xi32>
    %15 = arith.cmpi sge, %13, %14 : vector<16x128xi32>
    %c9_i32 = arith.constant 9 : i32
    %16 = vector.broadcast %c9_i32 : i32 to vector<16x128xi32>
    %17 = arith.cmpi slt, %13, %16 : vector<16x128xi32>
    %18 = arith.andi %15, %17 : vector<16x128xi1>
    %cst_11 = arith.constant -1.000000e+30 : f32
    %19 = vector.broadcast %cst_11 : f32 to vector<16x128xf32>
    %20 = arith.select %18, %12, %19 : vector<16x128xi1>, vector<16x128xf32>
    %cst_12 = arith.constant dense<0xFF800000> : vector<16xf32>
    %21 = vector.multi_reduction <maximumf>, %20, %cst_12 [1] : vector<16x128xf32> to vector<16xf32>
    %22 = vector.shape_cast %21 : vector<16xf32> to vector<16x1xf32>
    %23 = vector.broadcast %22 : vector<16x1xf32> to vector<16x128xf32>
    %24 = arith.subf %20, %23 : vector<16x128xf32>
    %25 = math.exp %24 : vector<16x128xf32>
    %cst_13 = arith.constant dense<0.000000e+00> : vector<16xf32>
    %26 = vector.multi_reduction <add>, %25, %cst_13 [1] : vector<16x128xf32> to vector<16xf32>
    %27 = vector.shape_cast %26 : vector<16xf32> to vector<16x1xf32>
    %28 = tpu.reciprocal %27 {approx = true} : vector<16x1xf32> -> vector<16x1xf32>
    %29 = vector.broadcast %28 : vector<16x1xf32> to vector<16x128xf32>
    %30 = arith.mulf %25, %29 : vector<16x128xf32>
    %c0_i32 = arith.constant 0 : i32
    %31 = vector.broadcast %c0_i32 : i32 to vector<16x128xi32>
    %32 = arith.cmpi eq, %13, %31 : vector<16x128xi32>
    %cst_14 = arith.constant 0.000000e+00 : f32
    %33 = vector.broadcast %cst_14 : f32 to vector<16x128xf32>
    %34 = arith.maximumf %12, %33 : vector<16x128xf32>
    %cst_15 = arith.constant 0.000000e+00 : f32
    %35 = vector.broadcast %cst_15 : f32 to vector<16x128xf32>
    %36 = arith.select %32, %34, %35 : vector<16x128xi1>, vector<16x128xf32>
    %37 = arith.addf %30, %36 : vector<16x128xf32>
    %c0_16 = arith.constant 0 : index
    %c0_17 = arith.constant 0 : index
    %38 = vector.load %arg6[%c0_16, %c0_17] : memref<16x128xf32, #tpu.memory_space<vmem>>, vector<16x128xf32>
    tpu.vector_store %arg6[%c0_16, %c0_17], %37 {strides = array<i32>} : memref<16x128xf32, #tpu.memory_space<vmem>>, vector<16x128xf32>,
    return
  }
  func.func @transform_0(%arg0: i32) -> (i32, i32) {
    %c0_i32 = arith.constant 0 : i32
    %c0_i32_0 = arith.constant 0 : i32
    return %arg0, %c0_i32 : i32, i32
  }
  func.func @transform_1(%arg0: i32) -> (i32, i32) {
    %c0_i32 = arith.constant 0 : i32
    %c0_i32_0 = arith.constant 0 : i32
    %c0_i32_1 = arith.constant 0 : i32
    return %c0_i32, %c0_i32_0 : i32, i32
  }
  func.func @transform_2(%arg0: i32) -> (i32, i32) {
    %c0_i32 = arith.constant 0 : i32
    %c0_i32_0 = arith.constant 0 : i32
    %c0_i32_1 = arith.constant 0 : i32
    return %c0_i32, %c0_i32_0 : i32, i32
  }
  func.func @transform_3(%arg0: i32) -> (i32, i32) {
    %c0_i32 = arith.constant 0 : i32
    %c0_i32_0 = arith.constant 0 : i32
    %c0_i32_1 = arith.constant 0 : i32
    return %c0_i32, %c0_i32_0 : i32, i32
  }
  func.func @transform_4(%arg0: i32) -> (i32, i32) {
    %c0_i32 = arith.constant 0 : i32
    %c0_i32_0 = arith.constant 0 : i32
    %c0_i32_1 = arith.constant 0 : i32
    return %c0_i32, %c0_i32_0 : i32, i32
  }
  func.func @transform_5(%arg0: i32) -> (i32, i32) {
    %c0_i32 = arith.constant 0 : i32
    %c0_i32_0 = arith.constant 0 : i32
    return %arg0, %c0_i32 : i32, i32
  }
}

</mosaic_0001>

<llo_original>
// kernel: tpu_custom_call.1
$region0: #{tpu_custom_call.1}
  #allocation0 [shape = 'u32[]', space=smem, size = 0x4, offset = 0x4, fixed_abs, tag = 'smem constant byte address 0x4 - core index']
  #allocation1 [shape = 'u32[144,128]{1,0:T(1,128)}', space=vmem, size = 0x12000, scoped, tag = 'internal scratch']
  %s0 = inlined_call_operand.hbm [shape: f32[16,16], index: 0, kind: input, shape index: {}]
  %s1 = inlined_call_operand.hbm [shape: f32[16,64], index: 1, kind: input, shape index: {}]
  %s2 = inlined_call_operand.vmem [shape: f32[1,64], index: 2, kind: input, shape index: {}]
  %s3 = inlined_call_operand.hbm [shape: f32[64,128], index: 3, kind: input, shape index: {}]
  %s4 = inlined_call_operand.vmem [shape: f32[1,128], index: 4, kind: input, shape index: {}]
  %s5 = inlined_call_operand.hbm [shape: f32[16,128], index: 5, kind: output, shape index: {}]
  %s6 = sld [smem:[#allocation0]]
  $region42: #{tpu_custom_call.1} parent=0
    _
  %s8 = ssub.s32 1, %s6
  %s9 = scalar_select 0, %s8, %s6
  $region1: #{tpu_custom_call.1} parent=0
    #allocation2 [shape = 'u8[8192]{0}', space=vmem, size = 0x2000, scoped, tag = 'input window, operand 0, single buffered']
    #allocation3 [shape = 's32[1]{0}', space=sflag, size = 0x4, scoped, tag = 'scoped memory for tpu_custom_call.1']
    #allocation4 [shape = 's32[1]{0}', space=sflag, size = 0x4, scoped, tag = 'scoped memory for tpu_custom_call.1']
    #allocation5 [shape = 'u8[8192]{0}', space=vmem, size = 0x2000, scoped, tag = 'input window, operand 1, single buffered']
    #allocation6 [shape = 's32[1]{0}', space=sflag, size = 0x4, scoped, tag = 'scoped memory for tpu_custom_call.1']
    #allocation7 [shape = 'u8[32768]{0}', space=vmem, size = 0x8000, scoped, tag = 'input window, operand 3, single buffered']
    #allocation8 [shape = 'u8[8192]{0}', space=vmem, size = 0x2000, scoped, tag = 'output window, operand 0, single buffered']
    %10 = vsyncpa [#allocation3], 0
    %11 = vsyncpa [#allocation6], 0
    %12 = vsyncpa [#allocation4], 0
    // Predicated region
    $region2: #{tpu_custom_call.1} parent=1 // pred_check
      _
    $region3: #{tpu_custom_call.1} parent=1 // pred_check_branch
      %14 = sbr.rel (0) target = $region5
    $region4: #{tpu_custom_call.1} parent=1 // pred_region
      %s16 = ssub.s32 256, 256
      %17 = vsyncadd [#allocation3], %s16
      %s18 = sshll.u32 [#allocation2], 4
      %s19 = int_to_ptr.vmem [resolvable:$true] %s18
      %24 = dma.hbm_to_vmem [thread:$0]  %s0, 256, %s19, [#allocation3], 128, 128, 8
    $region5: #{tpu_custom_call.1} parent=1 // pred_fallthru
      _
    // Predicated region
    $region6: #{tpu_custom_call.1} parent=1 // pred_check
      _
    $region7: #{tpu_custom_call.1} parent=1 // pred_check_branch
      %26 = sbr.rel (0) target = $region9
    $region8: #{tpu_custom_call.1} parent=1 // pred_region
      %s28 = ssub.s32 256, 256
      %29 = vsyncadd [#allocation6], %s28
      %s30 = sshll.u32 [#allocation5], 4
      %s31 = int_to_ptr.vmem [resolvable:$true] %s30
      %36 = dma.hbm_to_vmem [thread:$0]  %s1, 256, %s31, [#allocation6], 128, 128, 8
    $region9: #{tpu_custom_call.1} parent=1 // pred_fallthru
      _
    // Predicated region
    $region10: #{tpu_custom_call.1} parent=1 // pred_check
      _
    $region11: #{tpu_custom_call.1} parent=1 // pred_check_branch
      %38 = sbr.rel (0) target = $region13
    $region12: #{tpu_custom_call.1} parent=1 // pred_region
      _
    $region13: #{tpu_custom_call.1} parent=1 // pred_fallthru
      _
    // Predicated region
    $region14: #{tpu_custom_call.1} parent=1 // pred_check
      _
    $region15: #{tpu_custom_call.1} parent=1 // pred_check_branch
      %40 = sbr.rel (0) target = $region17
    $region16: #{tpu_custom_call.1} parent=1 // pred_region
      %s42 = ssub.s32 1024, 1024
      %43 = vsyncadd [#allocation6], %s42
      %s44 = sshll.u32 [#allocation7], 4
      %s45 = int_to_ptr.vmem [resolvable:$true] %s44
      %50 = dma.hbm_to_vmem [thread:$0]  %s3, 1024, %s45, [#allocation6], 128, 128, 8
    $region17: #{tpu_custom_call.1} parent=1 // pred_fallthru
      _
    // Predicated region
    $region18: #{tpu_custom_call.1} parent=1 // pred_check
      _
    $region19: #{tpu_custom_call.1} parent=1 // pred_check_branch
      %52 = sbr.rel (0) target = $region21
    $region20: #{tpu_custom_call.1} parent=1 // pred_region
      _
    $region21: #{tpu_custom_call.1} parent=1 // pred_fallthru
      _
    // Predicated region
    $region22: #{tpu_custom_call.1} parent=1 // pred_check
      _
    $region23: #{tpu_custom_call.1} parent=1 // pred_check_branch
      %54 = sbr.rel (0) target = $region25
    $region24: #{tpu_custom_call.1} parent=1 // pred_region
      %55 = dma.done [#allocation3], 256
    $region25: #{tpu_custom_call.1} parent=1 // pred_fallthru
      _
    // Predicated region
    $region26: #{tpu_custom_call.1} parent=1 // pred_check
      _
    $region27: #{tpu_custom_call.1} parent=1 // pred_check_branch
      %57 = sbr.rel (0) target = $region29
    $region28: #{tpu_custom_call.1} parent=1 // pred_region
      %58 = dma.done [#allocation6], 256
    $region29: #{tpu_custom_call.1} parent=1 // pred_fallthru
      _
    // Predicated region
    $region30: #{tpu_custom_call.1} parent=1 // pred_check
      _
    $region31: #{tpu_custom_call.1} parent=1 // pred_check_branch
      %60 = sbr.rel (0) target = $region33
    $region32: #{tpu_custom_call.1} parent=1 // pred_region
      %61 = dma.done [#allocation6], 1024
    $region33: #{tpu_custom_call.1} parent=1 // pred_fallthru
      _
    %v62 = vld [vmem:[#allocation2] sm:$0xff]
    %v63 = vld [vmem:[#allocation2 + $0x8] sm:$0xff]
    %v64 = vld [vmem:[#allocation5] sm:$0xff]
    %v65 = vld [vmem:[#allocation5 + $0x8] sm:$0xff]
    %v66 = vld [vmem:[%s2] sm:$0x1]
    %v68 = vlaneseq
    %v69 = vshrl.u32 %v68, 7
    %v70 = vsub.s32 0, %v69
    %v71 = vrot.slane %v66, %v70
    %vm73 = vcmask 130048
    %v75 = vsel %vm73, %v62, 0
    %v78 = vsel %vm73, %v63, 0
    %80 = vmatprep.subr.mxu0 0.0
    %81 = vmatpush1.msra.mxu0 %v64
    %82 = vmatprep.subr.mxu0 0.0
    %83 = vmatpush1.msra.mxu0 %v65
    %84 = vmatprep.subr.mxu0 0.0
    %85 = vmatpush1.msra.mxu0 0.0
    %86 = vmatprep.subr.mxu0 0.0
    %87 = vmatpush1.msra.mxu0 0.0
    %88 = vmatprep.subr.mxu0 0.0
    %89 = vmatpush1.msra.mxu0 0.0
    %90 = vmatprep.subr.mxu0 0.0
    %91 = vmatpush1.msra.mxu0 0.0
    %92 = vmatprep.subr.mxu0 0.0
    %93 = vmatpush1.msra.mxu0 0.0
    %94 = vmatprep.subr.mxu0 0.0
    %95 = vmatpush1.msra.mxu0 0.0
    %96 = vmatprep.subr.mxu0 0.0
    %97 = vmatpush1.msra.mxu0 0.0
    %98 = vmatprep.subr.mxu0 0.0
    %99 = vmatpush1.msra.mxu0 0.0
    %100 = vmatprep.subr.mxu0 0.0
    %101 = vmatpush1.msra.mxu0 0.0
    %102 = vmatprep.subr.mxu0 0.0
    %103 = vmatpush1.msra.mxu0 0.0
    %104 = vmatprep.subr.mxu0 0.0
    %105 = vmatpush1.msra.mxu0 0.0
    %106 = vmatprep.subr.mxu0 0.0
    %107 = vmatpush1.msra.mxu0 0.0
    %108 = vmatprep.subr.mxu0 0.0
    %109 = vmatpush1.msra.mxu0 0.0
    %110 = vmatprep.subr.mxu0 0.0
    %111 = vmatpush1.msra.mxu0 0.0
    %112 = vmatprep.subr.mxu0 0.0
    %113 = vmatpush1.msra.mxu0 0.0
    %114 = vmatprep.subr.mxu0 0.0
    %115 = vmatpush1.msra.mxu0 0.0
    %116 = vmatprep.subr.mxu0 0.0
    %117 = vmatpush1.msra.mxu0 0.0
    %118 = vmatprep.subr.mxu0 0.0
    %119 = vmatpush1.msra.mxu0 0.0
    %120 = vmatprep.subr.mxu0 0.0
    %121 = vmatpush1.msra.mxu0 0.0
    %122 = vmatprep.subr.mxu0 0.0
    %123 = vmatpush1.msra.mxu0 0.0
    %124 = vmatprep.subr.mxu0 0.0
    %125 = vmatpush1.msra.mxu0 0.0
    %126 = vmatprep.subr.mxu0 0.0
    %127 = vmatpush1.msra.mxu0 0.0
    %128 = vmatprep.subr.mxu0 0.0
    %129 = vmatpush1.msra.mxu0 0.0
    %130 = vmatprep.subr.mxu0 0.0
    %131 = vmatpush1.msra.mxu0 0.0
    %132 = vmatprep.subr.mxu0 0.0
    %133 = vmatpush1.msra.mxu0 0.0
    %134 = vmatprep.subr.mxu0 0.0
    %135 = vmatpush1.msra.mxu0 0.0
    %136 = vmatprep.subr.mxu0 0.0
    %137 = vmatpush1.msra.mxu0 0.0
    %138 = vmatprep.subr.mxu0 0.0
    %139 = vmatpush1.msra.mxu0 0.0
    %140 = vmatprep.subr.mxu0 0.0
    %141 = vmatpush1.msra.mxu0 0.0
    %142 = vmatprep.subr.mxu0 0.0
    %143 = vmatpush1.msra.mxu0 0.0
    %144 = vmatprep.mubr.f32.mxu0 0.0
    %145 = vmatmul.mubr.f32.gmra.mrb[0].mxu0 %v75
    %v146 = vpop.f32.mrb[0].mxu0
    %v147 = vadd.f32 %v71, %v146
    %v148 = vpop.f32.mrb[0].mxu0
    %149 = vmatprep.mubr.f32.mxu0 0.0
    %150 = vmatmul.mubr.f32.gmra.mrb[0].mxu0 %v78
    %v151 = vpop.f32.mrb[0].mxu0
    %v152 = vadd.f32 %v71, %v151
    %v153 = vpop.f32.mrb[0].mxu0
    %154 = vdwg.mxu0
    %v155 = vmax.f32 %v147, 0.0
    %v156 = vmax.f32 %v152, 0.0
    %v157 = vld [vmem:[#allocation7] sm:$0xff]
    %v158 = vld [vmem:[#allocation7 + $0x8] sm:$0xff]
    %v159 = vld [vmem:[#allocation7 + $0x10] sm:$0xff]
    %v160 = vld [vmem:[#allocation7 + $0x18] sm:$0xff]
    %v161 = vld [vmem:[#allocation7 + $0x20] sm:$0xff]
    %v162 = vld [vmem:[#allocation7 + $0x28] sm:$0xff]
    %v163 = vld [vmem:[#allocation7 + $0x30] sm:$0xff]
    %v164 = vld [vmem:[#allocation7 + $0x38] sm:$0xff]
    %v165 = vld [vmem:[%s4] sm:$0x1]
    %v167 = vlaneseq
    %v168 = vshrl.u32 %v167, 7
    %v169 = vsub.s32 0, %v168
    %v170 = vrot.slane %v165, %v169
    %vm172 = vcmask 523264
    %v174 = vsel %vm172, %v155, 0
    %v177 = vsel %vm172, %v156, 0
    %179 = vmatprep.subr.mxu0 0.0
    %180 = vmatpush1.msra.mxu0 %v157
    %181 = vmatprep.subr.mxu0 0.0
    %182 = vmatpush1.msra.mxu0 %v158
    %183 = vmatprep.subr.mxu0 0.0
    %184 = vmatpush1.msra.mxu0 %v159
    %185 = vmatprep.subr.mxu0 0.0
    %186 = vmatpush1.msra.mxu0 %v160
    %187 = vmatprep.subr.mxu0 0.0
    %188 = vmatpush1.msra.mxu0 %v161
    %189 = vmatprep.subr.mxu0 0.0
    %190 = vmatpush1.msra.mxu0 %v162
    %191 = vmatprep.subr.mxu0 0.0
    %192 = vmatpush1.msra.mxu0 %v163
    %193 = vmatprep.subr.mxu0 0.0
    %194 = vmatpush1.msra.mxu0 %v164
    %195 = vmatprep.subr.mxu0 0.0
    %196 = vmatpush1.msra.mxu0 0.0
    %197 = vmatprep.subr.mxu0 0.0
    %198 = vmatpush1.msra.mxu0 0.0
    %199 = vmatprep.subr.mxu0 0.0
    %200 = vmatpush1.msra.mxu0 0.0
    %201 = vmatprep.subr.mxu0 0.0
    %202 = vmatpush1.msra.mxu0 0.0
    %203 = vmatprep.subr.mxu0 0.0
    %204 = vmatpush1.msra.mxu0 0.0
    %205 = vmatprep.subr.mxu0 0.0
    %206 = vmatpush1.msra.mxu0 0.0
    %207 = vmatprep.subr.mxu0 0.0
    %208 = vmatpush1.msra.mxu0 0.0
    %209 = vmatprep.subr.mxu0 0.0
    %210 = vmatpush1.msra.mxu0 0.0
    %211 = vmatprep.subr.mxu0 0.0
    %212 = vmatpush1.msra.mxu0 0.0
    %213 = vmatprep.subr.mxu0 0.0
    %214 = vmatpush1.msra.mxu0 0.0
    %215 = vmatprep.subr.mxu0 0.0
    %216 = vmatpush1.msra.mxu0 0.0
    %217 = vmatprep.subr.mxu0 0.0
    %218 = vmatpush1.msra.mxu0 0.0
    %219 = vmatprep.subr.mxu0 0.0
    %220 = vmatpush1.msra.mxu0 0.0
    %221 = vmatprep.subr.mxu0 0.0
    %222 = vmatpush1.msra.mxu0 0.0
    %223 = vmatprep.subr.mxu0 0.0
    %224 = vmatpush1.msra.mxu0 0.0
    %225 = vmatprep.subr.mxu0 0.0
    %226 = vmatpush1.msra.mxu0 0.0
    %227 = vmatprep.subr.mxu0 0.0
    %228 = vmatpush1.msra.mxu0 0.0
    %229 = vmatprep.subr.mxu0 0.0
    %230 = vmatpush1.msra.mxu0 0.0
    %231 = vmatprep.subr.mxu0 0.0
    %232 = vmatpush1.msra.mxu0 0.0
    %233 = vmatprep.subr.mxu0 0.0
    %234 = vmatpush1.msra.mxu0 0.0
    %235 = vmatprep.subr.mxu0 0.0
    %236 = vmatpush1.msra.mxu0 0.0
    %237 = vmatprep.subr.mxu0 0.0
    %238 = vmatpush1.msra.mxu0 0.0
    %239 = vmatprep.subr.mxu0 0.0
    %240 = vmatpush1.msra.mxu0 0.0
    %241 = vmatprep.subr.mxu0 0.0
    %242 = vmatpush1.msra.mxu0 0.0
    %243 = vmatprep.mubr.f32.mxu0 0.0
    %244 = vmatmul.mubr.f32.gmra.mrb[0].mxu0 %v174
    %v245 = vpop.f32.mrb[0].mxu0
    %v246 = vadd.f32 %v170, %v245
    %v247 = vpop.f32.mrb[0].mxu0
    %248 = vmatprep.mubr.f32.mxu0 0.0
    %249 = vmatmul.mubr.f32.gmra.mrb[0].mxu0 %v177
    %v250 = vpop.f32.mrb[0].mxu0
    %v251 = vadd.f32 %v170, %v250
    %v252 = vpop.f32.mrb[0].mxu0
    %253 = vdwg.mxu0
    %v254 = vlaneseq
    %v255 = vand.u32 %v254, 127
    %vm256 = vcmp.ge.s32.totalorder %v255, 1
    %vm257 = vcmp.lt.s32.totalorder %v255, 9
    %vm258 = vmand %vm256, %vm257
    %v259 = vsel %vm258, %v246, -1e+30
    %v260 = vsel %vm258, %v251, -1e+30
    %261 = vmax.xlane.f32.xlu0 %v259
    %v262 = vpop.xlane.xlu0 %261
    %263 = vmax.xlane.f32.xlu0 %v260
    %v264 = vpop.xlane.xlu0 %263
    %v265 = vsub.f32 %v259, %v262
    %v266 = vsub.f32 %v260, %v264
    %v267 = vmul.f32 %v265, 1.442695
    %v268 = vpow.pop %v267
    %v269 = vmul.f32 %v266, 1.442695
    %v270 = vpow.pop %v269
    %271 = vadd.xlane.f32.xlu0 %v268
    %v272 = vpop.xlane.xlu0 %271
    %273 = vadd.xlane.f32.xlu0 %v270
    %v274 = vpop.xlane.xlu0 %273
    %v275 = vrcp.pop %v272
    %v276 = vrcp.pop %v274
    %v277 = vmul.f32 %v268, %v275
    %v278 = vmul.f32 %v270, %v276
    %vm279 = vcmp.eq.s32.totalorder %v255, 0
    %v280 = vmax.f32 %v246, 0.0
    %v281 = vmax.f32 %v251, 0.0
    %v282 = vsel %vm279, %v280, 0.0
    %v283 = vsel %vm279, %v281, 0.0
    %v284 = vadd.f32 %v277, %v282
    %v285 = vadd.f32 %v278, %v283
    %286 = vst [vmem:[#allocation8] sm:$0xff] %v284
    %287 = vst [vmem:[#allocation8 + $0x8] sm:$0xff] %v285
    // Predicated region
    $region34: #{tpu_custom_call.1} parent=1 // pred_check
      _
    $region35: #{tpu_custom_call.1} parent=1 // pred_check_branch
      %289 = sbr.rel (0) target = $region37
    $region36: #{tpu_custom_call.1} parent=1 // pred_region
      %s291 = ssub.s32 256, 256
      %292 = vsyncadd [#allocation4], %s291
      %s293 = sshll.u32 [#allocation8], 4
      %s294 = int_to_ptr.vmem [resolvable:$true] %s293
      %299 = dma.vmem_to_hbm [thread:$0]  %s294, 256, %s5, [#allocation4], 128, 128, 8
    $region37: #{tpu_custom_call.1} parent=1 // pred_fallthru
      _
    // Predicated region
    $region38: #{tpu_custom_call.1} parent=1 // pred_check
      _
    $region39: #{tpu_custom_call.1} parent=1 // pred_check_branch
      %301 = sbr.rel (0) target = $region41
    $region40: #{tpu_custom_call.1} parent=1 // pred_region
      %302 = dma.done [#allocation4], 256
    $region41: #{tpu_custom_call.1} parent=1 // pred_fallthru
      _
    %303 = vsyncpa [#allocation3], 1
    %304 = vsyncpa [#allocation6], 1
    %305 = vsyncpa [#allocation4], 1

</llo_original>
